<compile_context>
chip_gen: v6e
topology: v6e:2x2x1
jax: 0.10.0
libtpu: 0.0.40
codegen_flags: <defaults>
</compile_context>

<pallas_src>
import math
import numpy as np
import jax
import jax.numpy as jnp
from jax.experimental import pallas as pl
from jax.experimental.pallas import tpu as pltpu


# Candidate lane widths (multiples of 128) for factoring the flat buffer into
# a 2-D (rows, lanes) slab.  For an HBM->HBM DMA the factorization does not
# change DMA efficiency (the copy is contiguous); it only controls how the row
# axis can be chunked across grid steps.
_LANE_WIDTHS = (4096, 2048, 1024, 512, 384, 256, 128)

# Keep each DMA descriptor at least this large so the ~0.35 us per-grid-step
# overhead stays a small fraction even at v7x's 3.2 TB/s HBM.
_MIN_CHUNK_BYTES = 4 * 1024 * 1024


def _dma_copy_kernel(x_hbm, o_hbm, sem):
    """One grid step = one large contiguous HBM->HBM DMA of a row chunk."""
    rows = x_hbm.shape[0]
    nchunks = pl.num_programs(0)
    chunk = rows // nchunks                       # wrapper guarantees divisibility
    start = pl.multiple_of(pl.program_id(0) * chunk, chunk)
    cp = pltpu.make_async_copy(
        x_hbm.at[pl.ds(start, chunk)],
        o_hbm.at[pl.ds(start, chunk)],
        sem,
    )
    cp.start()
    cp.wait()


def _pick_nchunks(rows, total_bytes):
    """>=2 chunks for medium/large slabs (v7x dual-TC DMA issue), each >= ~4 MiB."""
    for n in (8, 4, 2):
        if rows % n == 0 and total_bytes // n >= _MIN_CHUNK_BYTES:
            return n
    if rows % 2 == 0 and total_bytes >= 2 * 1024 * 1024:
        return 2
    return 1


def _pallas_dma_copy_2d(x2):
    """Identity copy of a (rows, lanes) slab via chunked HBM->HBM DMA."""
    rows, lanes = x2.shape
    itemsize = np.dtype(x2.dtype).itemsize
    total_bytes = rows * lanes * itemsize
    nchunks = _pick_nchunks(rows, total_bytes)
    return pl.pallas_call(
        _dma_copy_kernel,
        out_shape=jax.ShapeDtypeStruct((rows, lanes), x2.dtype),
        grid=(nchunks,),
        in_specs=[pl.BlockSpec(memory_space=pl.ANY)],    # raw HBM ref, no auto-DMA
        out_specs=pl.BlockSpec(memory_space=pl.ANY),     # raw HBM ref, written by DMA
        scratch_shapes=[pltpu.SemaphoreType.DMA(())],
        cost_estimate=pl.CostEstimate(
            flops=0, transcendentals=0, bytes_accessed=2 * total_bytes),
        compiler_params=pltpu.CompilerParams(
            dimension_semantics=("parallel",),           # shards chunks on v7x's 2 TCs
        ),
    )(x2)


def _squeeze_out_shape(in_shape):
    squeezed = tuple(d for d in in_shape if d != 1)
    if len(in_shape) > 0 and in_shape[0] == 0:
        # torch branch: size(0) == 0 -> squeeze().view(1, *squeezed_shape)
        return (1,) + squeezed
    return squeezed


def pallas_squeeze(x, *, force_copy=False):
    """Reproduce Squeeze.forward exactly.

    Default path is metadata-only (zero data movement).  force_copy=True
    routes the (identity) data movement through the Pallas HBM->HBM DMA kernel.
    """
    in_shape = tuple(int(d) for d in x.shape)
    out_shape = _squeeze_out_shape(in_shape)

    if not force_copy:
        # Squeeze on a contiguous buffer is a pure reshape: free.
        return jnp.reshape(x, out_shape)

    total = math.prod(in_shape) if in_shape else 1

    # Zero-element tensors: nothing to move; metadata-only reshape is exact.
    if total == 0:
        return jnp.reshape(x, out_shape)

    if total % 128 != 0:
        # TODO(synk): element count has no lane-dense factorization; squeeze is
        # metadata-only, so the reshape view is exact and the fastest path.
        return jnp.reshape(x, out_shape)

    # Factor the flat buffer into (rows, lanes); prefer rows >= 8 so tiny-rows
    # layouts are avoided, but any factorization is a valid identity copy.
    lanes = None
    for w in _LANE_WIDTHS:
        if total % w == 0 and total // w >= 8:
            lanes = w
            break
    if lanes is None:
        for w in _LANE_WIDTHS:
            if total % w == 0:
                lanes = w
                break
    rows = total // lanes

    x2 = jnp.reshape(x, (rows, lanes))           # metadata-only re-factorization
    out2 = _pallas_dma_copy_2d(x2)
    return jnp.reshape(out2, out_shape)


if __name__ == "__main__":
    key = jax.random.PRNGKey(0)

    # 1) Default (metadata-only) path: (2, 1, 16, 16) -> (2, 16, 16).
    x1 = jax.random.normal(key, (2, 1, 16, 16), dtype=jnp.float32)
    out1 = jax.block_until_ready(pallas_squeeze(x1))
    ref1 = jnp.squeeze(x1)
    assert out1.shape == ref1.shape and out1.dtype == ref1.dtype
    np.testing.assert_allclose(np.asarray(out1), np.asarray(ref1), rtol=0, atol=0)

    # 2) Pallas DMA kernel path (small, single chunk): same input, force_copy.
    out1k = jax.block_until_ready(pallas_squeeze(x1, force_copy=True))
    assert out1k.shape == ref1.shape
    np.testing.assert_allclose(np.asarray(out1k), np.asarray(ref1), rtol=0, atol=0)

    # 3) Pallas DMA kernel path, multi-chunk grid: (4, 1, 256, 1024) = 1Mi elems
    #    -> (256, 4096) slab, grid=(2,), ~2 MiB contiguous DMA per chunk.
    x3 = jax.random.normal(jax.random.PRNGKey(2), (4, 1, 256, 1024), dtype=jnp.float32)
    out3 = jax.block_until_ready(pallas_squeeze(x3, force_copy=True))
    ref3 = jnp.squeeze(x3)
    assert out3.shape == ref3.shape == (4, 256, 1024)
    np.testing.assert_allclose(np.asarray(out3), np.asarray(ref3), rtol=0, atol=0)

    # 4) Multiple singleton dims, element count not a multiple of 128
    #    -> metadata-only fallback even with force_copy.  (1, 4, 1, 8) -> (4, 8).
    x4 = jax.random.normal(jax.random.PRNGKey(1), (1, 4, 1, 8), dtype=jnp.float32)
    out4 = jax.block_until_ready(pallas_squeeze(x4, force_copy=True))
    ref4 = jnp.squeeze(x4)
    assert out4.shape == ref4.shape == (4, 8)
    np.testing.assert_allclose(np.asarray(out4), np.asarray(ref4), rtol=0, atol=0)

    # 5) Zero-element tensor with dim0 != 0: (4, 8, 0) stays (4, 8, 0).
    x5 = jnp.zeros((4, 8, 0), dtype=jnp.float32)
    out5 = jax.block_until_ready(pallas_squeeze(x5))
    assert out5.shape == (4, 8, 0)

    # 6) Empty-batch branch: dim0 == 0 -> view(1, *squeezed).  (0, 1, 3) -> (1, 0, 3).
    x6 = jnp.zeros((0, 1, 3), dtype=jnp.float32)
    out6 = jax.block_until_ready(pallas_squeeze(x6))
    assert out6.shape == (1, 0, 3)

    print("KERNEL_OK")
</pallas_src>

<mosaic_0001>
module attributes {stable_mosaic.version = 11 : i64} {
  func.func @_dma_copy_kernel(%arg0: i32, %arg1: memref<1x512xf32, #tpu.memory_space<any>>, %arg2: memref<1x512xf32, #tpu.memory_space<any>>, %arg3: memref<!tpu.dma_semaphore, #tpu.memory_space<semaphore_mem>>) attributes {dimension_semantics = [#tpu.dimension_semantics<parallel>], iteration_bounds = array<i64: 1>, scalar_prefetch = 0 : i64, scratch_operands = 1 : i64, tpu.core_type = #tpu.core_type<tc>, window_params = [{}, {}]} {
    %c1_i32 = arith.constant 1 : i32
    %0 = arith.muli %arg0, %c1_i32 : i32
    %1 = tpu.assume_multiple %0, 1 : i32
    %c0_i32 = arith.constant 0 : i32
    %2 = tpu.memref_slice %arg1[%1, %c0_i32] : memref<1x512xf32, #tpu.memory_space<any>> -> memref<1x512xf32, #tpu.memory_space<any>>
    %c0_i32_0 = arith.constant 0 : i32
    %3 = tpu.memref_slice %arg2[%1, %c0_i32_0] : memref<1x512xf32, #tpu.memory_space<any>> -> memref<1x512xf32, #tpu.memory_space<any>>
    tpu.enqueue_dma source(%2 : memref<1x512xf32, #tpu.memory_space<any>>) target(%3 : memref<1x512xf32, #tpu.memory_space<any>>) target_semaphore(%arg3 : memref<!tpu.dma_semaphore, #tpu.memory_space<semaphore_mem>>)
    %c0_i32_1 = arith.constant 0 : i32
    %4 = tpu.memref_slice %arg1[%1, %c0_i32_1] : memref<1x512xf32, #tpu.memory_space<any>> -> memref<1x512xf32, #tpu.memory_space<any>>
    %c0_i32_2 = arith.constant 0 : i32
    %5 = tpu.memref_slice %arg2[%1, %c0_i32_2] : memref<1x512xf32, #tpu.memory_space<any>> -> memref<1x512xf32, #tpu.memory_space<any>>
    tpu.wait_dma2 semaphore(%arg3 : memref<!tpu.dma_semaphore, #tpu.memory_space<semaphore_mem>>) src(%4 : memref<1x512xf32, #tpu.memory_space<any>>) dst(%5 : memref<1x512xf32, #tpu.memory_space<any>>)
    return
  }
}

</mosaic_0001>

<llo_original>
// kernel: tpu_custom_call.1
$region0: #{tpu_custom_call.1}
  #allocation0 [shape = 'u32[]', space=smem, size = 0x4, offset = 0x4, fixed_abs, tag = 'smem constant byte address 0x4 - core index']
  #allocation1 [shape = 'u32[144,128]{1,0:T(1,128)}', space=vmem, size = 0x12000, scoped, tag = 'internal scratch']
  #allocation2 [shape = 's32[1]{0}', space=sflag, size = 0x4, scoped, tag = 'scratch operand']
  #allocation3 [shape = 's32[]', space=sflag, size = 0x4, offset = 0, fixed_abs, tag = 'sflag constant byte address 0x0 - dummy sync flag']
  #allocation4 [shape = 'u32[0]{0}', space=smem, size = 0, offset = 0, fixed_abs, tag = 'smem constant byte address 0x0 - null']
  %s0 = inlined_call_operand.hbm [shape: f32[1,512], index: 0, kind: input, shape index: {}]
  %s1 = inlined_call_operand.hbm [shape: f32[1,512], index: 1, kind: output, shape index: {}]
  %s2 = sld [smem:[#allocation0]]
  $region2: #{tpu_custom_call.1} parent=0
    _
  %s4 = ssub.s32 1, %s2
  %s5 = scalar_select 0, %s4, %s2
  %s6 = smul.u32 0, 4
  %s7 = smul.addr %s6, 16
  %s8 = scalar_lea.hbm %s0, %s7
  %s9 = smul.addr %s6, 16
  %s10 = scalar_lea.hbm %s1, %s9
  %s12 = sshll.u32 1, 14
  %s13 = sxor.u32 4294967295, %s12
  %17 = dma.general %s8, 64, %s10, [#allocation2], 131072, [#allocation4], 0, 0
  %s18 = smul.u32 1, 4
  %s19 = sshll.u32 %s18, 4
  %20 = dma.done [#allocation2], %s19
  %21 = vsyncmov [#allocation2]
  %s22 = vpop.sfrf %21
  %p23 = scmp.eq.s32.totalorder %s22, 0
  %p24 = pneg %p23
  %26 = shalt.err (%p24)

</llo_original>
